<compile_context>
chip_gen: v6e
topology: v6e:2x2x1
jax: 0.10.0
libtpu: 0.0.40
codegen_flags: <defaults>
</compile_context>

<pallas_src>
import functools

import jax
import jax.numpy as jnp
from jax import lax
from jax.experimental import pallas as pl
from jax.experimental.pallas import tpu as pltpu

PAD_TOKEN_ID = 11
KEEP_RATIO = 0.7
MIN_KEPT = 1

# Estimated number of chunk-sized f32 temporaries Mosaic materializes for the
# elementwise chain (shifted / exp / where-select ...).
_TMP_COPIES = 4
# Target tokens per in-kernel compute chunk (temporary-footprint granularity).
_CHUNK_TOKENS = 1024


def _round_up(x, m):
    return (x + m - 1) // m * m


def _vmem_budget():
    """(working_set_budget_bytes, vmem_limit_bytes), TPU-generation aware."""
    cap = 64 * 1024 * 1024  # conservative default == v7x physical VMEM
    try:
        cap = int(pltpu.get_tpu_info().vmem_capacity_bytes)
    except Exception:
        pass
    if cap >= 96 * 1024 * 1024:
        # v5e / v6e: 128 MiB physical VMEM per TensorCore.
        return 40 * 1024 * 1024, 96 * 1024 * 1024
    # v7x: 64 MiB physical, 32 MiB scoped default.
    return 20 * 1024 * 1024, 48 * 1024 * 1024


def _choose_tiles(b, s, c, itemsize):
    """Pick (tile_b, tile_s, chunk_s, n_chunks) — byte-based, budget-driven."""
    q = max(8, 32 // itemsize)  # sublane quantum: 8 f32 / 16 bf16 / 32 int8
    budget, _ = _vmem_budget()

    # Bytes resident per token across the (double-buffered) DMA pipeline:
    #   logits block:  2 * C * itemsize
    #   targets block: (ts, 1) int32 lane-pads to (ts, 128) -> 2 * 128 * 4
    # TODO(synk): for small C (<128) a token-on-lane layout would recover the
    # (128/C)x lane waste and drop the targets lane padding, but it needs a
    # real transpose of the [B,S,C] HBM layout; skipped.
    per_token_dma = 2 * c * itemsize + 2 * 128 * 4
    temp_per_token = _TMP_COPIES * 4 * c

    # --- Case A: the whole sequence fits in one block (tile_s == s). --------
    # Temporaries stay block-sized here (s is small), so count them in full.
    tokens_a = max(q, budget // (per_token_dma + temp_per_token))
    if s <= tokens_a:
        tile_b = max(1, min(b, tokens_a // s))
        if b >= 2:
            # >= 2 steps on the *parallel* (batch) axis so both v7x TCs work.
            tile_b = min(tile_b, -(-b // 2))
        return tile_b, s, s, 1

    # --- Case B: long sequence -> tile the seq (reduction) axis. ------------
    # One sequence row per step; the in-kernel fori_loop chunks the compute so
    # the f32 temporaries stay chunk-sized and the DMA block can grow.
    tile_b = 1
    chunk_s = min(_round_up(_CHUNK_TOKENS, q),
                  max(q, (budget // 2) // max(temp_per_token, 1) // q * q))
    temp_bytes = temp_per_token * chunk_s
    tile_s = max(chunk_s,
                 max(0, budget - temp_bytes) // per_token_dma // chunk_s * chunk_s)
    tile_s = min(tile_s, _round_up(s, chunk_s))
    # TODO(synk): for extreme vocabularies where even one q-row chunk of f32
    # temporaries overflows VMEM, add a class-axis grid with an online
    # logsumexp instead of requiring the full class dim per block.
    return tile_b, tile_s, chunk_s, tile_s // chunk_s


def _ce_seq_sum_kernel(logits_ref, tgt_ref, sum_ref, *, pad_token_id, seq_len,
                       tile_s, chunk_s, n_chunks, mask_seq_tail):
    """Per-token CE (ignore_index) reduced to per-sequence loss sums.

    logits_ref: (tile_b, tile_s, C) float (f32 or bf16; upcast to f32)
    tgt_ref:    (tile_b, tile_s, 1) int32
    sum_ref:    (tile_b, 1, 1) f32 — accumulated across the seq-tile grid axis
    """
    j = pl.program_id(1)

    @pl.when(j == 0)
    def _():
        sum_ref[...] = jnp.zeros_like(sum_ref)

    def chunk_nll_sum(start):
        logits = logits_ref[:, pl.ds(start, chunk_s), :].astype(jnp.float32)
        tgt = tgt_ref[:, pl.ds(start, chunk_s), :]

        # Numerically stable log-softmax over the class (lane) axis.
        m = jnp.max(logits, axis=-1, keepdims=True)
        shifted = logits - m
        lse = jnp.log(jnp.sum(jnp.exp(shifted), axis=-1, keepdims=True))

        # Target-logit gather via compare + select (no dynamic gather on TPU).
        cls_ids = lax.broadcasted_iota(jnp.int32, logits.shape, 2)
        tgt_logit = jnp.sum(jnp.where(cls_ids == tgt, shifted, 0.0),
                            axis=-1, keepdims=True)
        nll = lse - tgt_logit

        valid = tgt != pad_token_id
        if mask_seq_tail:
            # Ragged tail: positions >= seq_len hold unspecified data
            # (un-padded partial edge block) — mask them out here.
            pos = (j * tile_s + start
                   + lax.broadcasted_iota(jnp.int32, tgt.shape, 1))
            valid = valid & (pos < seq_len)
        return jnp.sum(jnp.where(valid, nll, 0.0), axis=1, keepdims=True)

    if n_chunks == 1:
        sum_ref[...] += chunk_nll_sum(0)
    else:
        def body(ci, acc):
            start = pl.multiple_of(ci * chunk_s, chunk_s)
            return acc + chunk_nll_sum(start)

        sum_ref[...] += lax.fori_loop(
            0, n_chunks, body, jnp.zeros(sum_ref.shape, jnp.float32))


def per_sequence_ce_sums(predictions, targets, *, pad_token_id):
    """[B,S,C] logits + [B,S] int targets -> [B] masked per-sequence CE sums."""
    b, s, c = predictions.shape
    itemsize = jnp.dtype(predictions.dtype).itemsize
    tile_b, tile_s, chunk_s, n_chunks = _choose_tiles(b, s, c, itemsize)
    mask_seq_tail = (s % tile_s) != 0

    targets3 = targets.astype(jnp.int32)[..., None]  # (B, S, 1) — tiny

    n_tokens = b * s
    cost = pl.CostEstimate(
        flops=6 * n_tokens * c,
        transcendentals=n_tokens * (c + 1),
        bytes_accessed=n_tokens * c * itemsize + n_tokens * 4 + b * 4,
    )

    kernel = functools.partial(
        _ce_seq_sum_kernel, pad_token_id=pad_token_id, seq_len=s,
        tile_s=tile_s, chunk_s=chunk_s, n_chunks=n_chunks,
        mask_seq_tail=mask_seq_tail)

    _, vmem_limit = _vmem_budget()
    grid = (pl.cdiv(b, tile_b), pl.cdiv(s, tile_s))

    # TODO(synk): sweep pipeline_mode=pl.Buffered(3) on the logits spec and
    # confirm the binding slot (DMA vs EUP) per generation via a bundle dump.
    seq_sum = pl.pallas_call(
        kernel,
        out_shape=jax.ShapeDtypeStruct((b, 1, 1), jnp.float32),
        grid_spec=pltpu.PrefetchScalarGridSpec(
            num_scalar_prefetch=0,
            grid=grid,
            in_specs=[
                pl.BlockSpec((tile_b, tile_s, c), lambda i, j: (i, j, 0)),
                pl.BlockSpec((tile_b, tile_s, 1), lambda i, j: (i, j, 0)),
            ],
            out_specs=pl.BlockSpec((tile_b, 1, 1), lambda i, j: (i, 0, 0)),
        ),
        compiler_params=pltpu.CompilerParams(
            dimension_semantics=("parallel", "arbitrary"),
            vmem_limit_bytes=vmem_limit,
        ),
        cost_estimate=cost,
    )(predictions, targets3)

    return seq_sum[:, 0, 0]


def ohem_forward(predictions, targets, *, keep_ratio=KEEP_RATIO,
                 min_kept=MIN_KEPT, pad_token_id=PAD_TOKEN_ID):
    """Mirrors OnlineHardExampleMining.forward (fully jittable, no host syncs).

    predictions: [B, S, C] float (f32 or bf16 — pass bf16 only if the producer
                 already emits it; a standalone f32->bf16 cast is its own HBM
                 pass and nets zero).
    targets:     [B, S] int
    """
    b, s, _ = predictions.shape
    seq_sum = per_sequence_ce_sums(predictions, targets,
                                   pad_token_id=pad_token_id)
    # Valid-token counts on the tiny targets tensor in plain XLA (free).
    seq_cnt = jnp.sum((targets != pad_token_id).astype(jnp.float32), axis=1)

    # seq_losses = masked per-token losses summed per seq / mask.sum.clamp(min=1)
    seq_losses = seq_sum / jnp.maximum(seq_cnt, 1.0)
    # base_loss = losses.mean() over all B*S positions (pad positions are 0),
    # matching CrossEntropyLoss(ignore_index, reduction='none').mean().
    base_loss = jnp.sum(seq_sum) / (b * s)

    num_kept = max(min_kept, int(b * keep_ratio))
    if num_kept < b:
        hard_losses, _ = lax.top_k(seq_losses, num_kept)
        final_loss = jnp.mean(hard_losses)
        kept_ratio = num_kept / b
        avg_hard_loss = jnp.mean(hard_losses)     # jnp scalar (no .item() sync)
        avg_total_loss = jnp.mean(seq_losses)
    else:
        final_loss = jnp.mean(seq_losses)
        kept_ratio = 1.0
        avg_hard_loss = final_loss
        avg_total_loss = final_loss

    return {
        "base_loss": base_loss,
        "hard_loss": final_loss,
        "kept_ratio": kept_ratio,
        "avg_hard_loss": avg_hard_loss,
        "avg_total_loss": avg_total_loss,
        "total_loss": final_loss,
    }


def _ref_ohem(predictions, targets, *, keep_ratio, min_kept, pad_token_id):
    """Pure-JAX reference mirroring the PyTorch module (for verification)."""
    b, s, _ = predictions.shape
    logp = jax.nn.log_softmax(predictions.astype(jnp.float32), axis=-1)
    nll = -jnp.take_along_axis(
        logp, targets.astype(jnp.int32)[..., None], axis=-1)[..., 0]
    mask = targets != pad_token_id
    losses = jnp.where(mask, nll, 0.0)
    seq_losses = losses.sum(axis=1) / jnp.maximum(
        mask.sum(axis=1).astype(jnp.float32), 1.0)
    base_loss = losses.mean()
    num_kept = max(min_kept, int(b * keep_ratio))
    if num_kept < b:
        hard, _ = lax.top_k(seq_losses, num_kept)
        total = hard.mean()
    else:
        total = seq_losses.mean()
    return base_loss, total


if __name__ == "__main__":
    key = jax.random.PRNGKey(0)

    def run_case(case_key, b, s, c):
        k_pred, k_tgt, k_pad = jax.random.split(case_key, 3)
        predictions = jax.random.normal(k_pred, (b, s, c), dtype=jnp.float32)
        targets = jax.random.randint(k_tgt, (b, s), 0, c, dtype=jnp.int32)
        # Sprinkle in pad tokens so ignore_index / masking is exercised.
        pad_positions = jax.random.bernoulli(k_pad, 0.2, (b, s))
        targets = jnp.where(pad_positions, PAD_TOKEN_ID, targets)

        fwd = jax.jit(functools.partial(
            ohem_forward, keep_ratio=KEEP_RATIO, min_kept=MIN_KEPT,
            pad_token_id=PAD_TOKEN_ID))
        out = fwd(predictions, targets)
        jax.block_until_ready(out["total_loss"])
        jax.block_until_ready(out["base_loss"])

        ref_base, ref_total = _ref_ohem(
            predictions, targets, keep_ratio=KEEP_RATIO, min_kept=MIN_KEPT,
            pad_token_id=PAD_TOKEN_ID)
        assert jnp.allclose(out["base_loss"], ref_base, rtol=1e-3, atol=1e-3)
        assert jnp.allclose(out["total_loss"], ref_total, rtol=1e-3, atol=1e-3)
        return out

    k1, k2 = jax.random.split(key)
    run_case(k1, 4, 16, 32)   # even shapes (2 parallel batch tiles)
    run_case(k2, 3, 13, 32)   # ragged batch/seq tails — no wrapper padding
    print("KERNEL_OK")
</pallas_src>

<mosaic_0001>
module attributes {stable_mosaic.version = 11 : i64} {
  func.func @_ce_seq_sum_kernel(%arg0: i32, %arg1: i32, %arg2: memref<2x16x32xf32, #tpu.memory_space<vmem>>, %arg3: memref<2x16x1xi32, #tpu.memory_space<vmem>>, %arg4: memref<2x1x1xf32, #tpu.memory_space<vmem>>) attributes {dimension_semantics = [#tpu.dimension_semantics<parallel>, #tpu.dimension_semantics<arbitrary>], iteration_bounds = array<i64: 2, 1>, scalar_prefetch = 0 : i64, scratch_operands = 0 : i64, tpu.core_type = #tpu.core_type<tc>, window_params = [{transform_indices = @transform_0, window_bounds = array<i64: 2, 16, 32>}, {transform_indices = @transform_1, window_bounds = array<i64: 2, 16, 1>}, {transform_indices = @transform_2, window_bounds = array<i64: 2, 1, 1>}]} {
    %c0_i32 = arith.constant 0 : i32
    %0 = arith.cmpi eq, %arg1, %c0_i32 : i32
    %1 = arith.extui %0 : i1 to i32
    %c0_i32_0 = arith.constant 0 : i32
    %2 = arith.cmpi ne, %1, %c0_i32_0 : i32
    scf.if %2 {
      %cst_17 = arith.constant 0.000000e+00 : f32
      %30 = vector.broadcast %cst_17 : f32 to vector<2x1x1xf32>
      %c0_18 = arith.constant 0 : index
      %c0_19 = arith.constant 0 : index
      %c0_20 = arith.constant 0 : index
      %31 = vector.load %arg4[%c0_18, %c0_19, %c0_20] : memref<2x1x1xf32, #tpu.memory_space<vmem>>, vector<2x1x1xf32>
      tpu.vector_store %arg4[%c0_18, %c0_19, %c0_20], %30 {strides = array<i32>} : memref<2x1x1xf32, #tpu.memory_space<vmem>>, vector<2x1x1xf32>,
    } else {
    }
    %c0 = arith.constant 0 : index
    %c0_1 = arith.constant 0 : index
    %c0_2 = arith.constant 0 : index
    %3 = vector.load %arg4[%c0, %c0_1, %c0_2] : memref<2x1x1xf32, #tpu.memory_space<vmem>>, vector<2x1x1xf32>
    %c0_3 = arith.constant 0 : index
    %c0_4 = arith.constant 0 : index
    %c0_5 = arith.constant 0 : index
    %4 = vector.load %arg2[%c0_3, %c0_4, %c0_5] : memref<2x16x32xf32, #tpu.memory_space<vmem>>, vector<2x16x32xf32>
    %c0_6 = arith.constant 0 : index
    %c0_7 = arith.constant 0 : index
    %c0_8 = arith.constant 0 : index
    %5 = vector.load %arg3[%c0_6, %c0_7, %c0_8] : memref<2x16x1xi32, #tpu.memory_space<vmem>>, vector<2x16x1xi32>
    %cst = arith.constant dense<0xFF800000> : vector<2x16xf32>
    %6 = vector.multi_reduction <maximumf>, %4, %cst [2] : vector<2x16x32xf32> to vector<2x16xf32>
    %7 = vector.shape_cast %6 : vector<2x16xf32> to vector<2x16x1xf32>
    %8 = vector.broadcast %7 : vector<2x16x1xf32> to vector<2x16x32xf32>
    %9 = arith.subf %4, %8 : vector<2x16x32xf32>
    %10 = math.exp %9 : vector<2x16x32xf32>
    %cst_9 = arith.constant dense<0.000000e+00> : vector<2x16xf32>
    %11 = vector.multi_reduction <add>, %10, %cst_9 [2] : vector<2x16x32xf32> to vector<2x16xf32>
    %12 = vector.shape_cast %11 : vector<2x16xf32> to vector<2x16x1xf32>
    %13 = math.log %12 : vector<2x16x1xf32>
    %14 = tpu.iota {dimensions = array<i32: 2>} : vector<2x16x32xi32>
    %15 = vector.broadcast %5 : vector<2x16x1xi32> to vector<2x16x32xi32>
    %16 = arith.cmpi eq, %14, %15 : vector<2x16x32xi32>
    %cst_10 = arith.constant 0.000000e+00 : f32
    %17 = vector.broadcast %cst_10 : f32 to vector<2x16x32xf32>
    %18 = arith.select %16, %9, %17 : vector<2x16x32xi1>, vector<2x16x32xf32>
    %cst_11 = arith.constant dense<0.000000e+00> : vector<2x16xf32>
    %19 = vector.multi_reduction <add>, %18, %cst_11 [2] : vector<2x16x32xf32> to vector<2x16xf32>
    %20 = vector.shape_cast %19 : vector<2x16xf32> to vector<2x16x1xf32>
    %21 = arith.subf %13, %20 : vector<2x16x1xf32>
    %c11_i32 = arith.constant 11 : i32
    %22 = vector.broadcast %c11_i32 : i32 to vector<2x16x1xi32>
    %23 = arith.cmpi ne, %5, %22 : vector<2x16x1xi32>
    %cst_12 = arith.constant 0.000000e+00 : f32
    %24 = vector.broadcast %cst_12 : f32 to vector<2x16x1xf32>
    %25 = arith.select %23, %21, %24 : vector<2x16x1xi1>, vector<2x16x1xf32>
    %cst_13 = arith.constant dense<0.000000e+00> : vector<2x1xf32>
    %26 = vector.multi_reduction <add>, %25, %cst_13 [1] : vector<2x16x1xf32> to vector<2x1xf32>
    %27 = vector.shape_cast %26 : vector<2x1xf32> to vector<2x1x1xf32>
    %28 = arith.addf %3, %27 : vector<2x1x1xf32>
    %c0_14 = arith.constant 0 : index
    %c0_15 = arith.constant 0 : index
    %c0_16 = arith.constant 0 : index
    %29 = vector.load %arg4[%c0_14, %c0_15, %c0_16] : memref<2x1x1xf32, #tpu.memory_space<vmem>>, vector<2x1x1xf32>
    tpu.vector_store %arg4[%c0_14, %c0_15, %c0_16], %28 {strides = array<i32>} : memref<2x1x1xf32, #tpu.memory_space<vmem>>, vector<2x1x1xf32>,
    return
  }
  func.func @transform_0(%arg0: i32, %arg1: i32) -> (i32, i32, i32) {
    %c0_i32 = arith.constant 0 : i32
    %c0_i32_0 = arith.constant 0 : i32
    return %arg0, %arg1, %c0_i32 : i32, i32, i32
  }
  func.func @transform_1(%arg0: i32, %arg1: i32) -> (i32, i32, i32) {
    %c0_i32 = arith.constant 0 : i32
    %c0_i32_0 = arith.constant 0 : i32
    return %arg0, %arg1, %c0_i32 : i32, i32, i32
  }
  func.func @transform_2(%arg0: i32, %arg1: i32) -> (i32, i32, i32) {
    %c0_i32 = arith.constant 0 : i32
    %c0_i32_0 = arith.constant 0 : i32
    %c0_i32_1 = arith.constant 0 : i32
    return %arg0, %c0_i32, %c0_i32_0 : i32, i32, i32
  }
}

</mosaic_0001>

<llo_original>
// kernel: ohem_forward.1
$region0: #{ohem_forward.1}
  #allocation0 [shape = 'u32[]', space=smem, size = 0x4, offset = 0x4, fixed_abs, tag = 'smem constant byte address 0x4 - core index']
  #allocation1 [shape = 'u32[144,128]{1,0:T(1,128)}', space=vmem, size = 0x12000, scoped, tag = 'internal scratch']
  %s0 = inlined_call_operand.vmem [shape: f32[4,16,32], index: 0, kind: input, shape index: {}]
  %s1 = inlined_call_operand.vmem [shape: s32[4,16,1], index: 1, kind: input, shape index: {}]
  %s2 = inlined_call_operand.vmem [shape: f32[4,1,1], index: 2, kind: output, shape index: {}]
  %s3 = sld [smem:[#allocation0]]
  $region45: #{ohem_forward.1} parent=0
    _
  %s5 = ssub.s32 1, %s3
  %s6 = scalar_select 0, %s5, %s3
  loop: start=0, step=1, limit=4
  $region2: #{ohem_forward.1} parent=0 // loop_pre_header
    _
  $region3: #{ohem_forward.1} parent=0 // loop_header
    %s8 = sphi 0, %s12
    %p9 = scmp.ge.s32.totalorder %s8, 4
    %s15 = sphi 0, %s27
    %s16 = sphi 0, %s23
    %s17 = sphi 0, %s15
    %s18 = sphi 0, %s16
    %s19 = sphi 0, %s17
    %s20 = sphi 0, %s18
    %s32 = sphi 0, %s34
    %s35 = sphi 0, %s32
    %s36 = sphi 0, %s35
    %s52 = sphi 0, %s36
    %s60 = sphi 0, %s62
    %s63 = sphi 0, %s60
    %s64 = sphi 0, %s63
    %s80 = sphi 0, %s64
    %s86 = sphi 0, %s88
    %s89 = sphi 0, %s86
    %s90 = sphi 0, %s89
    %s106 = sphi 0, %s90
  $region4: #{ohem_forward.1} parent=0 // loop_header_branch
    %11 = sbr.rel (%p9) target = $region8
  $region5: #{ohem_forward.1} parent=0 // loop_body
    %s13 = ssub.s32 %s8, 1
    %s14 = ssub.s32 %s8, 2
    %s21 = sadd.s32 1, %s16
    %p22 = scmp.ge.s32.totalorder %s21, 1
    %s23 = scalar_select %p22, 0, %s21
    %s24 = sadd.s32 1, %s15
    %s25 = scalar_select %p22, %s24, %s15
    %p26 = scmp.ge.s32.totalorder %s25, 2
    %s27 = scalar_select %p26, 0, %s25
    %s28 = ssub.s32 %s15, %s27
    %s29 = ssub.s32 %s16, %s23
    %s30 = sor.u32 %s28, %s29
    %p31 = scmp.eq.s32.totalorder %s30, 0
    %s33 = sadd.s32 %s32, 1
    %s34 = scalar_select %p31, %s32, %s33
    %p37 = pneg %p31
    %p38 = scmp.eq.s32.totalorder %s8, 1
    %p39 = por %p37, %p38
    %p40 = scmp.ne.s32.totalorder %s32, %s35
    %p41 = scmp.eq.s32.totalorder %s8, 0
    %p42 = por %p40, %p41
    %p43 = scmp.ne.s32.totalorder %s32, %s35
    %p44 = scmp.eq.s32.totalorder %s13, 1
    %p45 = por %p43, %p44
    %p46 = scmp.ne.s32.totalorder %s35, %s36
    %p47 = scmp.eq.s32.totalorder %s13, 0
    %p48 = por %p46, %p47
    %p49 = scmp.ne.s32.totalorder %s35, %s36
    %p50 = scmp.eq.s32.totalorder %s14, 1
    %p51 = por %p49, %p50
    %p53 = scmp.ne.s32.totalorder %s36, %s52
    %p54 = scmp.eq.s32.totalorder %s14, 0
    %p55 = por %p53, %p54
    %s56 = ssub.s32 %s15, %s27
    %s57 = ssub.s32 %s16, %s23
    %s58 = sor.u32 %s56, %s57
    %p59 = scmp.eq.s32.totalorder %s58, 0
    %s61 = sadd.s32 %s60, 1
    %s62 = scalar_select %p59, %s60, %s61
    %p65 = pneg %p59
    %p66 = scmp.eq.s32.totalorder %s8, 1
    %p67 = por %p65, %p66
    %p68 = scmp.ne.s32.totalorder %s60, %s63
    %p69 = scmp.eq.s32.totalorder %s8, 0
    %p70 = por %p68, %p69
    %p71 = scmp.ne.s32.totalorder %s60, %s63
    %p72 = scmp.eq.s32.totalorder %s13, 1
    %p73 = por %p71, %p72
    %p74 = scmp.ne.s32.totalorder %s63, %s64
    %p75 = scmp.eq.s32.totalorder %s13, 0
    %p76 = por %p74, %p75
    %p77 = scmp.ne.s32.totalorder %s63, %s64
    %p78 = scmp.eq.s32.totalorder %s14, 1
    %p79 = por %p77, %p78
    %p81 = scmp.ne.s32.totalorder %s64, %s80
    %p82 = scmp.eq.s32.totalorder %s14, 0
    %p83 = por %p81, %p82
    %s84 = ssub.s32 %s15, %s27
    %p85 = scmp.eq.s32.totalorder %s84, 0
    %s87 = sadd.s32 %s86, 1
    %s88 = scalar_select %p85, %s86, %s87
    %p91 = pneg %p85
    %p92 = scmp.eq.s32.totalorder %s8, 1
    %p93 = por %p91, %p92
    %p94 = scmp.ne.s32.totalorder %s86, %s89
    %p95 = scmp.eq.s32.totalorder %s8, 0
    %p96 = por %p94, %p95
    %p97 = scmp.ne.s32.totalorder %s86, %s89
    %p98 = scmp.eq.s32.totalorder %s13, 1
    %p99 = por %p97, %p98
    %p100 = scmp.ne.s32.totalorder %s89, %s90
    %p101 = scmp.eq.s32.totalorder %s13, 0
    %p102 = por %p100, %p101
    %p103 = scmp.ne.s32.totalorder %s89, %s90
    %p104 = scmp.eq.s32.totalorder %s14, 1
    %p105 = por %p103, %p104
    %p107 = scmp.ne.s32.totalorder %s90, %s106
    %p108 = scmp.eq.s32.totalorder %s14, 0
    %p109 = por %p107, %p108
    %p110 = scmp.le.s32.totalorder 1, %s8
    %p111 = scmp.lt.s32.totalorder %s8, 3
    %p112 = pnand %p110, %p111
    %p113 = pneg %p112
    // Predicated region
    $region9: #{ohem_forward.1} parent=5 // pred_check
      _
    $region10: #{ohem_forward.1} parent=5 // pred_check_branch
      %115 = sbr.rel (%p112) target = $region12
    $region11: #{ohem_forward.1} parent=5 // pred_region
      %s116 = ssub.s32 %s8, 1
    $region12: #{ohem_forward.1} parent=5 // pred_fallthru
      _
    %p117 = scmp.lt.s32.totalorder %s8, 2
    // Predicated region
    $region13: #{ohem_forward.1} parent=5 // pred_check
      %p118 = pneg %p117
    $region14: #{ohem_forward.1} parent=5 // pred_check_branch
      %120 = sbr.rel (%p118) target = $region16
    $region15: #{ohem_forward.1} parent=5 // pred_region
      // Predicated region
      $region17: #{ohem_forward.1} parent=15 // pred_check
        %p121 = pneg %p42
      $region18: #{ohem_forward.1} parent=15 // pred_check_branch
        %123 = sbr.rel (%p121) target = $region20
      $region19: #{ohem_forward.1} parent=15 // pred_region
        %s124 = smul.u32 2, %s15
        %s125 = smul.u32 2, %s16
        %p126 = scmp.lt.s32.totalorder %s124, 3
        %s127 = scalar_select %p126, %s124, 3
        %p128 = scmp.lt.s32.totalorder %s125, 1
        %s129 = scalar_select %p128, %s125, 1
        %s130 = smul.addr %s127, 2
        %s131 = sadd.s32 %s129, %s130
        %s132 = smul.addr %s131, 8
        %s133 = scalar_lea.vmem %s0, %s132
        %s134 = smul.u32 2, %s15
        %s135 = smul.u32 2, %s16
      $region20: #{ohem_forward.1} parent=15 // pred_fallthru
        _
      // Predicated region
      $region21: #{ohem_forward.1} parent=15 // pred_check
        %p136 = pneg %p70
      $region22: #{ohem_forward.1} parent=15 // pred_check_branch
        %138 = sbr.rel (%p136) target = $region24
      $region23: #{ohem_forward.1} parent=15 // pred_region
        %s139 = smul.u32 2, %s15
        %s140 = smul.u32 2, %s16
        %p141 = scmp.lt.s32.totalorder %s139, 3
        %s142 = scalar_select %p141, %s139, 3
        %p143 = scmp.lt.s32.totalorder %s140, 1
        %s144 = scalar_select %p143, %s140, 1
        %s145 = smul.addr %s142, 2
        %s146 = sadd.s32 %s144, %s145
        %s147 = smul.addr %s146, 8
        %s148 = scalar_lea.vmem %s1, %s147
        %s149 = smul.u32 2, %s15
        %s150 = smul.u32 2, %s16
      $region24: #{ohem_forward.1} parent=15 // pred_fallthru
        _
    $region16: #{ohem_forward.1} parent=5 // pred_fallthru
      _
    %p151 = scmp.le.s32.totalorder 1, %s8
    %p152 = scmp.lt.s32.totalorder %s8, 3
    %p153 = pnand %p151, %p152
    %p154 = pneg %p153
    // Predicated region
    $region25: #{ohem_forward.1} parent=5 // pred_check
      _
    $region26: #{ohem_forward.1} parent=5 // pred_check_branch
      %156 = sbr.rel (%p153) target = $region28
    $region27: #{ohem_forward.1} parent=5 // pred_region
      %s157 = ssub.s32 %s8, 1
      %s158 = smul.u32 2, %s17
      %s159 = smul.u32 2, %s18
      %p160 = scmp.lt.s32.totalorder %s158, 3
      %s161 = scalar_select %p160, %s158, 3
      %p162 = scmp.lt.s32.totalorder %s159, 1
      %s163 = scalar_select %p162, %s159, 1
      %s164 = smul.addr %s161, 2
      %s165 = sadd.s32 %s163, %s164
      %s166 = smul.addr %s165, 8
      %s167 = scalar_lea.vmem %s0, %s166
      %p168 = pneg %p48
      %p169 = pneg %p45
      %s170 = smul.u32 2, %s17
      %s171 = smul.u32 2, %s18
      %p172 = scmp.lt.s32.totalorder %s170, 3
      %s173 = scalar_select %p172, %s170, 3
      %p174 = scmp.lt.s32.totalorder %s171, 1
      %s175 = scalar_select %p174, %s171, 1
      %s176 = smul.addr %s173, 2
      %s177 = sadd.s32 %s175, %s176
      %s178 = smul.addr %s177, 8
      %s179 = scalar_lea.vmem %s1, %s178
      %p180 = pneg %p76
      %p181 = pneg %p73
      %p182 = pneg %p102
      %p183 = pneg %p99
      %s184 = smul.u32 2, %s17
      %p185 = scmp.lt.s32.totalorder %s184, 3
      %s186 = scalar_select %p185, %s184, 3
      %s187 = scalar_lea.vmem %s2, %s186
      %s188 = smul.u32 2, %s17
      %s189 = smul.u32 2, %s18
      %p190 = scmp.lt.s32.totalorder %s188, 3
      %s191 = scalar_select %p190, %s188, 3
      %p192 = scmp.lt.s32.totalorder %s189, 1
      %s193 = scalar_select %p192, %s189, 1
      %s194 = smul.addr %s191, 2
      %s195 = sadd.s32 %s193, %s194
      %s196 = smul.addr %s195, 8
      %s197 = scalar_lea.vmem %s0, %s196
      %s198 = smul.u32 2, %s17
      %s199 = smul.u32 2, %s18
      %s200 = smul.u32 2, %s17
      %s201 = smul.u32 2, %s18
      %p202 = scmp.lt.s32.totalorder %s200, 3
      %s203 = scalar_select %p202, %s200, 3
      %p204 = scmp.lt.s32.totalorder %s201, 1
      %s205 = scalar_select %p204, %s201, 1
      %s206 = smul.addr %s203, 2
      %s207 = sadd.s32 %s205, %s206
      %s208 = smul.addr %s207, 8
      %s209 = scalar_lea.vmem %s1, %s208
      %s210 = smul.u32 2, %s17
      %s211 = smul.u32 2, %s18
      %s212 = smul.u32 2, %s17
      %p213 = scmp.lt.s32.totalorder %s212, 3
      %s214 = scalar_select %p213, %s212, 3
      %s215 = scalar_lea.vmem %s2, %s214
      %s216 = smul.u32 2, %s17
      %p217 = scmp.eq.s32.totalorder %s18, 0
      // Predicated region
      $region29: #{ohem_forward.1} parent=27 // pred_check
        %p218 = pneg %p217
      $region30: #{ohem_forward.1} parent=27 // pred_check_branch
        %220 = sbr.rel (%p218) target = $region32
      $region31: #{ohem_forward.1} parent=27 // pred_region
        %vm221 = vcmask 0
        %222 = vst.msk [vmem:[%s215] sm:$0x1] %vm221, 0.0
        %223 = vst.msk [vmem:[%s215 + $0x1] sm:$0x1] %vm221, 0.0
      $region32: #{ohem_forward.1} parent=27 // pred_fallthru
        _
      %v224 = vld [vmem:[%s215] sm:$0x1]
      %v225 = vld [vmem:[%s215 + $0x1] sm:$0x1]
      %v226 = vld [vmem:[%s197] sm:$0xff]
      %v227 = vld [vmem:[%s197 + $0x8] sm:$0xff]
      %v228 = vld [vmem:[%s197 + $0x10] sm:$0xff]
      %v229 = vld [vmem:[%s197 + $0x18] sm:$0xff]
      %v230 = vld [vmem:[%s209] sm:$0xff]
      %v231 = vld [vmem:[%s209 + $0x8] sm:$0xff]
      %v232 = vld [vmem:[%s209 + $0x10] sm:$0xff]
      %v233 = vld [vmem:[%s209 + $0x18] sm:$0xff]
      %vm234 = vcmask 261120
      %v235 = vsel %vm234, %v226, -inf
      %236 = vmax.xlane.f32.xlu0 %v235
      %v237 = vpop.xlane.xlu0 %236
      %v238 = vsel %vm234, %v227, -inf
      %239 = vmax.xlane.f32.xlu0 %v238
      %v240 = vpop.xlane.xlu0 %239
      %v241 = vsel %vm234, %v228, -inf
      %242 = vmax.xlane.f32.xlu0 %v241
      %v243 = vpop.xlane.xlu0 %242
      %v244 = vsel %vm234, %v229, -inf
      %245 = vmax.xlane.f32.xlu0 %v244
      %v246 = vpop.xlane.xlu0 %245
      %v247 = vsub.f32 %v226, %v237
      %v248 = vsub.f32 %v227, %v240
      %v249 = vsub.f32 %v228, %v243
      %v250 = vsub.f32 %v229, %v246
      %v251 = vmul.f32 %v247, 1.442695
      %v252 = vpow.pop %v251
      %v253 = vmul.f32 %v248, 1.442695
      %v254 = vpow.pop %v253
      %v255 = vmul.f32 %v249, 1.442695
      %v256 = vpow.pop %v255
      %v257 = vmul.f32 %v250, 1.442695
      %v258 = vpow.pop %v257
      %v259 = vsel %vm234, %v252, 0.0
      %260 = vadd.xlane.f32.xlu0 %v259
      %v261 = vpop.xlane.xlu0 %260
      %v262 = vsel %vm234, %v254, 0.0
      %263 = vadd.xlane.f32.xlu0 %v262
      %v264 = vpop.xlane.xlu0 %263
      %v265 = vsel %vm234, %v256, 0.0
      %266 = vadd.xlane.f32.xlu0 %v265
      %v267 = vpop.xlane.xlu0 %266
      %v268 = vsel %vm234, %v258, 0.0
      %269 = vadd.xlane.f32.xlu0 %v268
      %v270 = vpop.xlane.xlu0 %269
      %v271 = vlog2.pop %v261
      %v272 = vmul.f32 %v271, 0.6931472
      %v273 = vlog2.pop %v264
      %v274 = vmul.f32 %v273, 0.6931472
      %v275 = vlog2.pop %v267
      %v276 = vmul.f32 %v275, 0.6931472
      %v277 = vlog2.pop %v270
      %v278 = vmul.f32 %v277, 0.6931472
      %v279 = vlaneseq
      %v280 = vand.u32 %v279, 127
      %281 = vset.pattern.permute.xlu0 0
      %282 = vperm.xlu0 %281, %v230
      %v283 = vpop.permute.xlu0 %282
      %284 = vset.pattern.permute.xlu0 0
      %285 = vperm.xlu0 %284, %v231
      %v286 = vpop.permute.xlu0 %285
      %287 = vset.pattern.permute.xlu0 0
      %288 = vperm.xlu0 %287, %v232
      %v289 = vpop.permute.xlu0 %288
      %290 = vset.pattern.permute.xlu0 0
      %291 = vperm.xlu0 %290, %v233
      %v292 = vpop.permute.xlu0 %291
      %vm293 = vcmp.eq.s32.totalorder %v280, %v283
      %vm294 = vcmp.eq.s32.totalorder %v280, %v286
      %vm295 = vcmp.eq.s32.totalorder %v280, %v289
      %vm296 = vcmp.eq.s32.totalorder %v280, %v292
      %v297 = vsel %vm293, %v247, 0.0
      %v298 = vsel %vm294, %v248, 0.0
      %v299 = vsel %vm295, %v249, 0.0
      %v300 = vsel %vm296, %v250, 0.0
      %v301 = vsel %vm234, %v297, 0.0
      %302 = vadd.xlane.f32.xlu0 %v301
      %v303 = vpop.xlane.xlu0 %302
      %v304 = vsel %vm234, %v298, 0.0
      %305 = vadd.xlane.f32.xlu0 %v304
      %v306 = vpop.xlane.xlu0 %305
      %v307 = vsel %vm234, %v299, 0.0
      %308 = vadd.xlane.f32.xlu0 %v307
      %v309 = vpop.xlane.xlu0 %308
      %v310 = vsel %vm234, %v300, 0.0
      %311 = vadd.xlane.f32.xlu0 %v310
      %v312 = vpop.xlane.xlu0 %311
      %v313 = vsub.f32 %v272, %v303
      %v314 = vsub.f32 %v274, %v306
      %v315 = vsub.f32 %v276, %v309
      %v316 = vsub.f32 %v278, %v312
      %vm317 = vcmp.ne.s32.totalorder %v230, 11
      %vm318 = vcmp.ne.s32.totalorder %v231, 11
      %vm319 = vcmp.ne.s32.totalorder %v232, 11
      %vm320 = vcmp.ne.s32.totalorder %v233, 11
      %v321 = vsel %vm317, %v313, 0.0
      %v322 = vsel %vm318, %v314, 0.0
      %v323 = vsel %vm319, %v315, 0.0
      %v324 = vsel %vm320, %v316, 0.0
      %vm325 = vcmask 7168
      %v326 = vsel %vm325, %v321, 0.0
      %v327 = vsel %vm325, %v322, 0.0
      %v328 = vadd.f32 %v326, %v327
      %v329 = vrot.slane %v328, 4
      %v330 = vadd.f32 %v328, %v329
      %v331 = vrot.slane %v330, 2
      %v332 = vadd.f32 %v330, %v331
      %v333 = vrot.slane %v332, 1
      %v334 = vadd.f32 %v332, %v333
      %v335 = vsel %vm325, %v323, 0.0
      %v336 = vsel %vm325, %v324, 0.0
      %v337 = vadd.f32 %v335, %v336
      %v338 = vrot.slane %v337, 4
      %v339 = vadd.f32 %v337, %v338
      %v340 = vrot.slane %v339, 2
      %v341 = vadd.f32 %v339, %v340
      %v342 = vrot.slane %v341, 1
      %v343 = vadd.f32 %v341, %v342
      %v344 = vadd.f32 %v224, %v334
      %v345 = vadd.f32 %v225, %v343
      %vm346 = vcmask 0
      %347 = vst.msk [vmem:[%s215] sm:$0x1] %vm346, %v344
      %348 = vst.msk [vmem:[%s215 + $0x1] sm:$0x1] %vm346, %v345
      %s349 = smul.u32 2, %s17
      %p350 = scmp.lt.s32.totalorder %s349, 3
      %s351 = scalar_select %p350, %s349, 3
      %s352 = scalar_lea.vmem %s2, %s351
      // Predicated region
      $region33: #{ohem_forward.1} parent=27 // pred_check
        %p353 = pneg %p99
      $region34: #{ohem_forward.1} parent=27 // pred_check_branch
        %355 = sbr.rel (%p353) target = $region36
      $region35: #{ohem_forward.1} parent=27 // pred_region
        %s356 = smul.u32 2, %s17
      $region36: #{ohem_forward.1} parent=27 // pred_fallthru
        _
    $region28: #{ohem_forward.1} parent=5 // pred_fallthru
      _
    %p357 = scmp.le.s32.totalorder 2, %s8
    // Predicated region
    $region37: #{ohem_forward.1} parent=5 // pred_check
      %p358 = pneg %p357
    $region38: #{ohem_forward.1} parent=5 // pred_check_branch
      %360 = sbr.rel (%p358) target = $region40
    $region39: #{ohem_forward.1} parent=5 // pred_region
      %s361 = ssub.s32 %s8, 2
      // Predicated region
      $region41: #{ohem_forward.1} parent=39 // pred_check
        %p362 = pneg %p105
      $region42: #{ohem_forward.1} parent=39 // pred_check_branch
        %364 = sbr.rel (%p362) target = $region44
      $region43: #{ohem_forward.1} parent=39 // pred_region
        %s365 = smul.u32 2, %s19
        %p366 = scmp.lt.s32.totalorder %s365, 3
        %s367 = scalar_select %p366, %s365, 3
        %s368 = scalar_lea.vmem %s2, %s367
      $region44: #{ohem_forward.1} parent=39 // pred_fallthru
        _
    $region40: #{ohem_forward.1} parent=5 // pred_fallthru
      _
  $region6: #{ohem_forward.1} parent=0 // loop_footer
    %s12 = sadd.s32 1, %s8
  $region7: #{ohem_forward.1} parent=0 // loop_footer_branch
    %7 = sbr.rel target = $region3
  $region8: #{ohem_forward.1} parent=0 // loop_exit
    _

</llo_original>
